<compile_context>
chip_gen: v7x
topology: tpu7x:2x2x1
jax: 0.10.0
libtpu: 0.0.40
codegen_flags: <defaults>
</compile_context>

<pallas_src>
import functools

import jax
import jax.numpy as jnp
from jax.experimental import pallas as pl
from jax.experimental.pallas import tpu as pltpu


def _sgated_fusion_kernel(xs_ref, xt_ref, w1_ref, b1_ref, w2_ref, b2_ref, o_ref):
    xs = xs_ref[...].astype(jnp.float32)
    xt = xt_ref[...].astype(jnp.float32)

    # Gated fusion (elementwise, VPU/EUP) — layout-agnostic, works on packed lanes.
    z = jax.nn.sigmoid(xs + xt)
    h = z * xs + (1.0 - z) * xt

    # GFC: two 1x1 "convs" == dense layers over the (packed, block-diagonal) feature axis.
    h1 = jnp.dot(h, w1_ref[...], preferred_element_type=jnp.float32) + b1_ref[...]
    h1 = jnp.maximum(h1, 0.0)  # ReLU
    out = jnp.dot(h1, w2_ref[...], preferred_element_type=jnp.float32) + b2_ref[...]

    o_ref[...] = out.astype(o_ref.dtype)


@functools.partial(jax.jit, static_argnames=("tm", "lanes"))
def sgated_fusion(xs, xt, w1, b1, w2, b2, *, tm=2048, lanes=128):
    """xs, xt: (B, T, N, D) float32; w1/w2: (D, D) as (in, out); b1/b2: (D,).

    Returns (B, T, N, D).  `lanes` controls lane-packing width (128 saturates the
    v5e MXU; 256 matches v6e/v7x).  `tm` is the packed-row tile size.
    """
    B, T, N, D = xs.shape
    M = B * T * N

    # Lane-packing factor: fold P consecutive (b,t,n) positions into the lane axis.
    P = lanes // D if (D <= lanes and lanes % D == 0) else 1
    Dp = P * D

    xs2 = xs.reshape(M, D)
    xt2 = xt.reshape(M, D)

    # Pad row count to a multiple of P only if required (fast path: no padding).
    M_pad = pl.cdiv(M, P) * P
    if M_pad != M:
        pad = ((0, M_pad - M), (0, 0))
        xs2 = jnp.pad(xs2, pad)
        xt2 = jnp.pad(xt2, pad)

    rows = M_pad // P
    # Row-major contiguous → these reshapes are free views, no HBM copies.
    xs2 = xs2.reshape(rows, Dp)
    xt2 = xt2.reshape(rows, Dp)

    # Block-diagonal weights: packed_row @ kron(I_P, W) applies W independently to
    # each D-lane group; biases are tiled across the P groups.
    if P > 1:
        eye = jnp.eye(P, dtype=w1.dtype)
        w1p = jnp.kron(eye, w1)
        w2p = jnp.kron(eye, w2)
        b1p = jnp.tile(b1, P).reshape(1, Dp)
        b2p = jnp.tile(b2, P).reshape(1, Dp)
    else:
        w1p, w2p = w1, w2
        b1p, b2p = b1.reshape(1, D), b2.reshape(1, D)

    # Clamp the tile to the packed row count; pad rows only if the tile doesn't divide.
    tm_eff = min(tm, rows)
    rows_pad = pl.cdiv(rows, tm_eff) * tm_eff
    if rows_pad != rows:
        pad = ((0, rows_pad - rows), (0, 0))
        xs2 = jnp.pad(xs2, pad)
        xt2 = jnp.pad(xt2, pad)

    grid = (rows_pad // tm_eff,)
    out = pl.pallas_call(
        _sgated_fusion_kernel,
        out_shape=jax.ShapeDtypeStruct((rows_pad, Dp), xs.dtype),
        grid_spec=pltpu.PrefetchScalarGridSpec(
            num_scalar_prefetch=0,
            grid=grid,
            in_specs=[
                pl.BlockSpec((tm_eff, Dp), lambda i: (i, 0)),   # packed XS rows
                pl.BlockSpec((tm_eff, Dp), lambda i: (i, 0)),   # packed XT rows
                pl.BlockSpec((Dp, Dp), lambda i: (0, 0)),       # block-diag W1 (in, out)
                pl.BlockSpec((1, Dp), lambda i: (0, 0)),        # tiled b1
                pl.BlockSpec((Dp, Dp), lambda i: (0, 0)),       # block-diag W2
                pl.BlockSpec((1, Dp), lambda i: (0, 0)),        # tiled b2
            ],
            out_specs=pl.BlockSpec((tm_eff, Dp), lambda i: (i, 0)),
        ),
        compiler_params=pltpu.CompilerParams(
            dimension_semantics=("parallel",)),  # lets v7x shard the grid over 2 TCs
    )(xs2, xt2, w1p, b1p, w2p, b2p)

    # Unpack (free when no padding was added; slices are no-ops then).
    out = out[:rows].reshape(M_pad, D)[:M]
    return out.reshape(B, T, N, D)


def _xavier_normal(key, fan_out, fan_in):
    # matches nn.init.xavier_normal_ on a (out, in, 1, 1) conv weight
    std = (2.0 / (fan_in + fan_out)) ** 0.5
    return std * jax.random.normal(key, (fan_out, fan_in), dtype=jnp.float32)


def _reference(xs, xt, w1, b1, w2, b2):
    z = jax.nn.sigmoid(xs + xt)
    h = z * xs + (1.0 - z) * xt
    h1 = jnp.maximum(jnp.einsum("btnd,de->btne", h, w1) + b1, 0.0)
    return jnp.einsum("btnd,de->btne", h1, w2) + b2


if __name__ == "__main__":
    # SGatedFusion(D=32, bn=False, bn_decay=None, device=...)
    B, T, N, D = 2, 8, 16, 32  # batch, num_step, num_nodes, D

    key = jax.random.PRNGKey(0)
    k_xs, k_xt, k_w1, k_w2 = jax.random.split(key, 4)

    XS = jax.random.normal(k_xs, (B, T, N, D), dtype=jnp.float32)
    XT = jax.random.normal(k_xt, (B, T, N, D), dtype=jnp.float32)

    # Conv2d(D, D, (1,1)) weights, xavier_normal init, zero bias.
    # PyTorch conv weight is (out, in, 1, 1); kernel consumes (in, out) so transpose.
    W1_pt = _xavier_normal(k_w1, D, D)
    W2_pt = _xavier_normal(k_w2, D, D)
    W1 = W1_pt.T
    W2 = W2_pt.T
    b1 = jnp.zeros((D,), dtype=jnp.float32)
    b2 = jnp.zeros((D,), dtype=jnp.float32)

    out = sgated_fusion(XS, XT, W1, b1, W2, b2)
    out = jax.block_until_ready(out)

    ref = _reference(XS, XT, W1, b1, W2, b2)
    assert out.shape == (B, T, N, D)
    assert jnp.allclose(out, ref, atol=1e-5, rtol=1e-5)

    print("KERNEL_OK")
</pallas_src>

<mosaic_0001>
module attributes {stable_mosaic.version = 11 : i64} {
  func.func @_sgated_fusion_kernel(%arg0: i32, %arg1: memref<64x128xf32, #tpu.memory_space<vmem>>, %arg2: memref<64x128xf32, #tpu.memory_space<vmem>>, %arg3: memref<128x128xf32, #tpu.memory_space<vmem>>, %arg4: memref<1x128xf32, #tpu.memory_space<vmem>>, %arg5: memref<128x128xf32, #tpu.memory_space<vmem>>, %arg6: memref<1x128xf32, #tpu.memory_space<vmem>>, %arg7: memref<64x128xf32, #tpu.memory_space<vmem>>) attributes {dimension_semantics = [#tpu.dimension_semantics<parallel>], iteration_bounds = array<i64: 1>, scalar_prefetch = 0 : i64, scratch_operands = 0 : i64, tpu.core_type = #tpu.core_type<tc>, window_params = [{transform_indices = @transform_0, window_bounds = array<i64: 64, 128>}, {transform_indices = @transform_1, window_bounds = array<i64: 64, 128>}, {pipeline_mode = #tpu.pipeline_mode<synchronous>, transform_indices = @transform_2, window_bounds = array<i64: 128, 128>}, {pipeline_mode = #tpu.pipeline_mode<synchronous>, transform_indices = @transform_3, window_bounds = array<i64: 1, 128>}, {pipeline_mode = #tpu.pipeline_mode<synchronous>, transform_indices = @transform_4, window_bounds = array<i64: 128, 128>}, {pipeline_mode = #tpu.pipeline_mode<synchronous>, transform_indices = @transform_5, window_bounds = array<i64: 1, 128>}, {transform_indices = @transform_6, window_bounds = array<i64: 64, 128>}]} {
    %c0 = arith.constant 0 : index
    %c0_0 = arith.constant 0 : index
    %0 = vector.load %arg1[%c0, %c0_0] : memref<64x128xf32, #tpu.memory_space<vmem>>, vector<64x128xf32>
    %c0_1 = arith.constant 0 : index
    %c0_2 = arith.constant 0 : index
    %1 = vector.load %arg2[%c0_1, %c0_2] : memref<64x128xf32, #tpu.memory_space<vmem>>, vector<64x128xf32>
    %2 = arith.addf %0, %1 : vector<64x128xf32>
    %3 = arith.negf %2 : vector<64x128xf32>
    %4 = math.exp %3 : vector<64x128xf32>
    %cst = arith.constant 1.000000e+00 : f32
    %5 = vector.broadcast %cst : f32 to vector<64x128xf32>
    %6 = arith.addf %5, %4 : vector<64x128xf32>
    %7 = arith.divf %5, %6 : vector<64x128xf32>
    %8 = arith.mulf %7, %0 : vector<64x128xf32>
    %cst_3 = arith.constant 1.000000e+00 : f32
    %9 = vector.broadcast %cst_3 : f32 to vector<64x128xf32>
    %10 = arith.subf %9, %7 : vector<64x128xf32>
    %11 = arith.mulf %10, %1 : vector<64x128xf32>
    %12 = arith.addf %8, %11 : vector<64x128xf32>
    %c0_4 = arith.constant 0 : index
    %c0_5 = arith.constant 0 : index
    %13 = vector.load %arg3[%c0_4, %c0_5] : memref<128x128xf32, #tpu.memory_space<vmem>>, vector<128x128xf32>
    %cst_6 = arith.constant dense<0.000000e+00> : vector<64x128xf32>
    %14 = tpu.matmul %12, %13, %cst_6 {dimension_numbers = #tpu.dot_dimension_numbers<[1], [0], [0], [1], [0, 0, 1, 1], [], []>} : vector<64x128xf32>, vector<128x128xf32>, vector<64x128xf32> -> vector<64x128xf32>
    %c0_7 = arith.constant 0 : index
    %c0_8 = arith.constant 0 : index
    %15 = vector.load %arg4[%c0_7, %c0_8] : memref<1x128xf32, #tpu.memory_space<vmem>>, vector<1x128xf32>
    %16 = vector.broadcast %15 : vector<1x128xf32> to vector<64x128xf32>
    %17 = arith.addf %14, %16 : vector<64x128xf32>
    %cst_9 = arith.constant 0.000000e+00 : f32
    %18 = vector.broadcast %cst_9 : f32 to vector<64x128xf32>
    %19 = arith.maximumf %17, %18 : vector<64x128xf32>
    %c0_10 = arith.constant 0 : index
    %c0_11 = arith.constant 0 : index
    %20 = vector.load %arg5[%c0_10, %c0_11] : memref<128x128xf32, #tpu.memory_space<vmem>>, vector<128x128xf32>
    %cst_12 = arith.constant dense<0.000000e+00> : vector<64x128xf32>
    %21 = tpu.matmul %19, %20, %cst_12 {dimension_numbers = #tpu.dot_dimension_numbers<[1], [0], [0], [1], [0, 0, 1, 1], [], []>} : vector<64x128xf32>, vector<128x128xf32>, vector<64x128xf32> -> vector<64x128xf32>
    %c0_13 = arith.constant 0 : index
    %c0_14 = arith.constant 0 : index
    %22 = vector.load %arg6[%c0_13, %c0_14] : memref<1x128xf32, #tpu.memory_space<vmem>>, vector<1x128xf32>
    %23 = vector.broadcast %22 : vector<1x128xf32> to vector<64x128xf32>
    %24 = arith.addf %21, %23 : vector<64x128xf32>
    %c0_15 = arith.constant 0 : index
    %c0_16 = arith.constant 0 : index
    %25 = vector.load %arg7[%c0_15, %c0_16] : memref<64x128xf32, #tpu.memory_space<vmem>>, vector<64x128xf32>
    tpu.vector_store %arg7[%c0_15, %c0_16], %24 {strides = array<i32>} : memref<64x128xf32, #tpu.memory_space<vmem>>, vector<64x128xf32>,
    return
  }
  func.func @transform_0(%arg0: i32) -> (i32, i32) {
    %c0_i32 = arith.constant 0 : i32
    %c0_i32_0 = arith.constant 0 : i32
    return %arg0, %c0_i32 : i32, i32
  }
  func.func @transform_1(%arg0: i32) -> (i32, i32) {
    %c0_i32 = arith.constant 0 : i32
    %c0_i32_0 = arith.constant 0 : i32
    return %arg0, %c0_i32 : i32, i32
  }
  func.func @transform_2(%arg0: i32) -> (i32, i32) {
    %c0_i32 = arith.constant 0 : i32
    %c0_i32_0 = arith.constant 0 : i32
    %c0_i32_1 = arith.constant 0 : i32
    return %c0_i32, %c0_i32_0 : i32, i32
  }
  func.func @transform_3(%arg0: i32) -> (i32, i32) {
    %c0_i32 = arith.constant 0 : i32
    %c0_i32_0 = arith.constant 0 : i32
    %c0_i32_1 = arith.constant 0 : i32
    return %c0_i32, %c0_i32_0 : i32, i32
  }
  func.func @transform_4(%arg0: i32) -> (i32, i32) {
    %c0_i32 = arith.constant 0 : i32
    %c0_i32_0 = arith.constant 0 : i32
    %c0_i32_1 = arith.constant 0 : i32
    return %c0_i32, %c0_i32_0 : i32, i32
  }
  func.func @transform_5(%arg0: i32) -> (i32, i32) {
    %c0_i32 = arith.constant 0 : i32
    %c0_i32_0 = arith.constant 0 : i32
    %c0_i32_1 = arith.constant 0 : i32
    return %c0_i32, %c0_i32_0 : i32, i32
  }
  func.func @transform_6(%arg0: i32) -> (i32, i32) {
    %c0_i32 = arith.constant 0 : i32
    %c0_i32_0 = arith.constant 0 : i32
    return %arg0, %c0_i32 : i32, i32
  }
}

</mosaic_0001>

<llo_original>
// kernel: tile.13
$region0: #{tile.13}
  #allocation0 [shape = 's32[1]{0}', space=sflag, size = 0x4, scoped, tag = 'scoped memory for tile.13']
  %s0 = inlined_call_operand.vmem [shape: f32[32], index: 0, kind: input, shape index: {}]
  %s1 = inlined_call_operand.vmem [shape: f32[4,32], index: 1, kind: output, shape index: {}]
  // Predicated region
  $region2: #{tile.13} parent=0 // pred_check
    _
  $region3: #{tile.13} parent=0 // pred_check_branch
    %3 = sbr.rel (0) target = $region5
  $region4: #{tile.13} parent=0 // pred_region
    _
  $region5: #{tile.13} parent=0 // pred_fallthru
    _
  %v4 = vld [vmem:[%s0] ss:$0 sm:$0xff]
  %5 = vst [vmem:[%s1] sm:$0xf] %v4

// kernel: tile.14
$region0: #{tile.14}
  %s0 = inlined_call_operand.vmem [shape: f32[4,32], index: 0, kind: input, shape index: {}]
  %s1 = inlined_call_operand.vmem [shape: f32[1,128], index: 1, kind: output, shape index: {}]
  $region1: #{tile.14} parent=0
    #allocation0 [shape = 'u8[4096]{0}', space=vmem, size = 0x1000, scoped, tag = 'scoped mem for output reshape']
    #allocation1 [shape = 'u8[4096]{0}', space=vmem, size = 0x1000, scoped, tag = 'scoped mem for input reshape']
    %s3 = sshllo.u32 0, 4
    %v4 = vld [vmem:[%s0] sm:%s3]
    %5 = vst [vmem:[#allocation1] sm:%s3] %v4
    %v6 = vld [vmem:[#allocation1] sm:$0x1]
    %vm7 = vcmask 261120
    %8 = vst.msk [vmem:[#allocation0] sm:$0x1] %vm7, %v6
    %s9 = scalar_lea.vmem [#allocation1], 3
    %v10 = vld [vmem:[%s9] sm:$0x1]
    %11 = vrot.lane.b32.xlu0 %v10, 96
    %v12 = vpop.permute.xlu0 %11
    %vm13 = vcmask 1048320
    %14 = vst.msk [vmem:[#allocation0] sm:$0x1] %vm13, %v12
    %s15 = scalar_lea.vmem [#allocation1], 2
    %v16 = vld [vmem:[%s15] sm:$0x1]
    %17 = vrot.lane.b32.xlu0 %v16, 64
    %v18 = vpop.permute.xlu0 %17
    %vm19 = vcmask 785920
    %20 = vst.msk [vmem:[#allocation0] sm:$0x1] %vm19, %v18
    %s21 = scalar_lea.vmem [#allocation1], 1
    %v22 = vld [vmem:[%s21] sm:$0x1]
    %23 = vrot.lane.b32.xlu0 %v22, 32
    %v24 = vpop.permute.xlu0 %23
    %vm25 = vcmask 523520
    %26 = vst.msk [vmem:[#allocation0] sm:$0x1] %vm25, %v24
    %s28 = sshllo.u32 0, 1
    %v30 = vld [vmem:[#allocation0] sm:%s28]
    %s31 = sshllo.u32 0, 1
    %32 = vst [vmem:[%s1] sm:%s31] %v30

</llo_original>
